<compile_context>
chip_gen: v6e
topology: v6e:2x2x1
jax: 0.10.0
libtpu: 0.0.40
codegen_flags: <defaults>
</compile_context>

<pallas_src>
import jax
import jax.numpy as jnp
from jax.experimental import pallas as pl
from jax.experimental.pallas import tpu as pltpu


def _distance_kernel(a_ref, p_ref, n_ref, out_ref):
    # a/p/n: (bm, D) tiles (D = full, possibly lane-unaligned, feature dim).
    # out:   (bm, 2) tile; column 0 = ap distance, column 1 = an distance.
    # Compute in the native input dtype (bf16 stays bf16 on v6e/v7x), like torch.
    a = a_ref[...]
    ap = jnp.max(jnp.abs(a - p_ref[...]), axis=1, keepdims=True)
    an = jnp.max(jnp.abs(a - n_ref[...]), axis=1, keepdims=True)
    out_ref[:, 0:1] = ap.astype(out_ref.dtype)
    out_ref[:, 1:2] = an.astype(out_ref.dtype)


def _round_up(x, m):
    return (x + m - 1) // m * m


def distance_layer(anchor, positive, negative, *, block_rows=None):
    """Pallas implementation of DistanceLayer.forward.

    anchor, positive, negative: (B, D) arrays (same shape/dtype).
    Returns (ap_distance, an_distance), each of shape (B,), in the input dtype.
    """
    assert anchor.shape == positive.shape == negative.shape
    assert anchor.dtype == positive.dtype == negative.dtype
    B, D = anchor.shape
    dtype = anchor.dtype
    itemsize = jnp.dtype(dtype).itemsize

    # Sublane granularity: 8 for 4-byte dtypes, 16 for bf16, 32 for int8/fp8.
    sub = max(8, 32 // max(itemsize, 1))
    # Physical VMEM bytes per row per input: the lane dim is padded to 128 in
    # VMEM even though we never pad it in HBM.
    row_bytes = _round_up(D, 128) * itemsize

    # Generation-aware VMEM sizing (v5e/v6e: 128 MiB physical; v7x: 64 MiB/TC).
    try:
        vmem_cap = int(pltpu.get_tpu_info().vmem_capacity_bytes)
    except Exception:
        vmem_cap = 64 * 1024 * 1024  # conservative (v7x) fallback
    vmem_limit = min((vmem_cap * 3) // 4, 96 * 1024 * 1024)
    vmem_budget = min(vmem_cap // 2, 64 * 1024 * 1024)

    if block_rows is None:
        # ~4 MiB of combined input bytes per grid step keeps the ~0.35 us
        # per-step overhead negligible while staying well inside VMEM.
        target_step_bytes = 4 * 1024 * 1024
        bm = target_step_bytes // (3 * row_bytes)
        # Double-buffered inputs + double-buffered merged (bm, 2) output
        # (lane-padded to 128 in VMEM) must fit the budget.
        vmem_per_row = 2 * 3 * row_bytes + 2 * 128 * itemsize
        bm = min(bm, vmem_budget // vmem_per_row)
        # Give megacore (v7x) at least two grid steps to shard when the batch
        # is big enough; harmless on single-TC chips.
        if B >= 2 * sub:
            bm = min(bm, _round_up(pl.cdiv(B, 2), sub))
    else:
        bm = int(block_rows)
    bm = max(sub, (bm // sub) * sub)
    # A block never needs to exceed the batch; a full-extent batch block is
    # legal even when B is not sublane-aligned.
    bm = min(bm, B)

    grid = (pl.cdiv(B, bm),)

    # Full-extent (unpadded) lane dim: no HBM padding pass; Mosaic masks the
    # lane tail of the per-row max reduction.  Batch edge block may overhang
    # B; those garbage rows never mix into valid rows (per-row reduction) and
    # are clamped away on output writeback.
    emb_spec = pl.BlockSpec((bm, D), lambda i: (i, 0))
    out_spec = pl.BlockSpec((bm, 2), lambda i: (i, 0))

    out = pl.pallas_call(
        _distance_kernel,
        out_shape=jax.ShapeDtypeStruct((B, 2), dtype),
        grid_spec=pltpu.PrefetchScalarGridSpec(
            num_scalar_prefetch=0,
            grid=grid,
            in_specs=[emb_spec, emb_spec, emb_spec],
            out_specs=out_spec,
        ),
        compiler_params=pltpu.CompilerParams(
            # Row tiles are fully independent -> let megacore (v7x) shard them.
            dimension_semantics=("parallel",),
            vmem_limit_bytes=int(vmem_limit),
        ),
    )(anchor, positive, negative)

    return out[:, 0], out[:, 1]


if __name__ == "__main__":
    base_key = jax.random.PRNGKey(0)

    def check(B, D, dtype, block_rows=None, tol=1e-6):
        k1, k2, k3 = jax.random.split(jax.random.fold_in(base_key, B * 1000 + D), 3)
        a = jax.random.normal(k1, (B, D), dtype=jnp.float32).astype(dtype)
        p = jax.random.normal(k2, (B, D), dtype=jnp.float32).astype(dtype)
        n = jax.random.normal(k3, (B, D), dtype=jnp.float32).astype(dtype)

        ap, an = distance_layer(a, p, n, block_rows=block_rows)
        jax.block_until_ready((ap, an))

        ap_ref = jnp.max(jnp.abs(a - p), axis=1)
        an_ref = jnp.max(jnp.abs(a - n), axis=1)
        assert ap.shape == (B,) and an.shape == (B,)
        assert ap.dtype == dtype and an.dtype == dtype
        assert jnp.allclose(ap.astype(jnp.float32), ap_ref.astype(jnp.float32),
                            atol=tol), f"ap mismatch (B={B}, D={D}, {dtype})"
        assert jnp.allclose(an.astype(jnp.float32), an_ref.astype(jnp.float32),
                            atol=tol), f"an mismatch (B={B}, D={D}, {dtype})"

    # Small shapes consistent with the module (embedding triplets).
    check(8, 32, jnp.float32)                     # single tile, small D
    check(32, 200, jnp.float32, block_rows=8)     # multi-step grid + unaligned D
    check(12, 200, jnp.float32, block_rows=8)     # partial batch edge block
    check(10, 200, jnp.float32)                   # fully unaligned full-extent block
    check(16, 256, jnp.bfloat16, tol=1e-2)        # bf16-native compute path

    print("KERNEL_OK")
</pallas_src>

<mosaic_0001>
module attributes {stable_mosaic.version = 11 : i64} {
  func.func @_distance_kernel(%arg0: i32, %arg1: memref<8x32xf32, #tpu.memory_space<vmem>>, %arg2: memref<8x32xf32, #tpu.memory_space<vmem>>, %arg3: memref<8x32xf32, #tpu.memory_space<vmem>>, %arg4: memref<8x2xf32, #tpu.memory_space<vmem>>) attributes {dimension_semantics = [#tpu.dimension_semantics<parallel>], iteration_bounds = array<i64: 1>, scalar_prefetch = 0 : i64, scratch_operands = 0 : i64, tpu.core_type = #tpu.core_type<tc>, window_params = [{transform_indices = @transform_0, window_bounds = array<i64: 8, 32>}, {transform_indices = @transform_1, window_bounds = array<i64: 8, 32>}, {transform_indices = @transform_2, window_bounds = array<i64: 8, 32>}, {transform_indices = @transform_3, window_bounds = array<i64: 8, 2>}]} {
    %c0 = arith.constant 0 : index
    %c0_0 = arith.constant 0 : index
    %0 = vector.load %arg1[%c0, %c0_0] : memref<8x32xf32, #tpu.memory_space<vmem>>, vector<8x32xf32>
    %c0_1 = arith.constant 0 : index
    %c0_2 = arith.constant 0 : index
    %1 = vector.load %arg2[%c0_1, %c0_2] : memref<8x32xf32, #tpu.memory_space<vmem>>, vector<8x32xf32>
    %2 = arith.subf %0, %1 : vector<8x32xf32>
    %3 = math.absf %2 : vector<8x32xf32>
    %cst = arith.constant dense<0xFF800000> : vector<8xf32>
    %4 = vector.multi_reduction <maximumf>, %3, %cst [1] : vector<8x32xf32> to vector<8xf32>
    %5 = vector.shape_cast %4 : vector<8xf32> to vector<8x1xf32>
    %c0_3 = arith.constant 0 : index
    %c0_4 = arith.constant 0 : index
    %6 = vector.load %arg3[%c0_3, %c0_4] : memref<8x32xf32, #tpu.memory_space<vmem>>, vector<8x32xf32>
    %7 = arith.subf %0, %6 : vector<8x32xf32>
    %8 = math.absf %7 : vector<8x32xf32>
    %cst_5 = arith.constant dense<0xFF800000> : vector<8xf32>
    %9 = vector.multi_reduction <maximumf>, %8, %cst_5 [1] : vector<8x32xf32> to vector<8xf32>
    %10 = vector.shape_cast %9 : vector<8xf32> to vector<8x1xf32>
    %c0_6 = arith.constant 0 : index
    %c0_7 = arith.constant 0 : index
    %11 = vector.load %arg4[%c0_6, %c0_7] : memref<8x2xf32, #tpu.memory_space<vmem>>, vector<8x1xf32>
    tpu.vector_store %arg4[%c0_6, %c0_7], %5 {strides = array<i32>} : memref<8x2xf32, #tpu.memory_space<vmem>>, vector<8x1xf32>,
    %c0_8 = arith.constant 0 : index
    %c1 = arith.constant 1 : index
    %12 = vector.load %arg4[%c0_8, %c1] : memref<8x2xf32, #tpu.memory_space<vmem>>, vector<8x1xf32>
    tpu.vector_store %arg4[%c0_8, %c1], %10 {strides = array<i32>} : memref<8x2xf32, #tpu.memory_space<vmem>>, vector<8x1xf32>,
    return
  }
  func.func @transform_0(%arg0: i32) -> (i32, i32) {
    %c0_i32 = arith.constant 0 : i32
    %c0_i32_0 = arith.constant 0 : i32
    return %arg0, %c0_i32 : i32, i32
  }
  func.func @transform_1(%arg0: i32) -> (i32, i32) {
    %c0_i32 = arith.constant 0 : i32
    %c0_i32_0 = arith.constant 0 : i32
    return %arg0, %c0_i32 : i32, i32
  }
  func.func @transform_2(%arg0: i32) -> (i32, i32) {
    %c0_i32 = arith.constant 0 : i32
    %c0_i32_0 = arith.constant 0 : i32
    return %arg0, %c0_i32 : i32, i32
  }
  func.func @transform_3(%arg0: i32) -> (i32, i32) {
    %c0_i32 = arith.constant 0 : i32
    %c0_i32_0 = arith.constant 0 : i32
    return %arg0, %c0_i32 : i32, i32
  }
}

</mosaic_0001>

<llo_original>
// kernel: tpu_custom_call.1
$region0: #{tpu_custom_call.1}
  #allocation0 [shape = 'u32[]', space=smem, size = 0x4, offset = 0x4, fixed_abs, tag = 'smem constant byte address 0x4 - core index']
  #allocation1 [shape = 'u32[144,128]{1,0:T(1,128)}', space=vmem, size = 0x12000, scoped, tag = 'internal scratch']
  %s0 = inlined_call_operand.hbm [shape: f32[8,32], index: 0, kind: input, shape index: {}]
  %s1 = inlined_call_operand.hbm [shape: f32[8,32], index: 1, kind: input, shape index: {}]
  %s2 = inlined_call_operand.hbm [shape: f32[8,32], index: 2, kind: input, shape index: {}]
  %s3 = inlined_call_operand.vmem [shape: f32[8,2], index: 3, kind: output, shape index: {}]
  %s4 = sld [smem:[#allocation0]]
  $region34: #{tpu_custom_call.1} parent=0
    _
  %s6 = ssub.s32 1, %s4
  %s7 = scalar_select 0, %s6, %s4
  $region1: #{tpu_custom_call.1} parent=0
    #allocation2 [shape = 'u8[4096]{0}', space=vmem, size = 0x1000, scoped, tag = 'input window, operand 0, single buffered']
    #allocation3 [shape = 's32[1]{0}', space=sflag, size = 0x4, scoped, tag = 'scoped memory for tpu_custom_call.1']
    #allocation4 [shape = 'u8[4096]{0}', space=vmem, size = 0x1000, scoped, tag = 'input window, operand 1, single buffered']
    #allocation5 [shape = 's32[1]{0}', space=sflag, size = 0x4, scoped, tag = 'scoped memory for tpu_custom_call.1']
    #allocation6 [shape = 'u8[4096]{0}', space=vmem, size = 0x1000, scoped, tag = 'input window, operand 2, single buffered']
    %8 = vsyncpa [#allocation3], 0
    %9 = vsyncpa [#allocation5], 0
    // Predicated region
    $region2: #{tpu_custom_call.1} parent=1 // pred_check
      _
    $region3: #{tpu_custom_call.1} parent=1 // pred_check_branch
      %11 = sbr.rel (0) target = $region5
    $region4: #{tpu_custom_call.1} parent=1 // pred_region
      %s13 = ssub.s32 128, 128
      %14 = vsyncadd [#allocation3], %s13
      %s16 = sshll.u32 [#allocation2], 4
      %s17 = int_to_ptr.vmem [resolvable:$true] %s16
      %19 = dma.hbm_to_vmem [thread:$0]  %s0, 128, %s17, [#allocation3]
    $region5: #{tpu_custom_call.1} parent=1 // pred_fallthru
      _
    // Predicated region
    $region6: #{tpu_custom_call.1} parent=1 // pred_check
      _
    $region7: #{tpu_custom_call.1} parent=1 // pred_check_branch
      %21 = sbr.rel (0) target = $region9
    $region8: #{tpu_custom_call.1} parent=1 // pred_region
      %s23 = ssub.s32 128, 128
      %24 = vsyncadd [#allocation5], %s23
      %s26 = sshll.u32 [#allocation4], 4
      %s27 = int_to_ptr.vmem [resolvable:$true] %s26
      %29 = dma.hbm_to_vmem [thread:$0]  %s1, 128, %s27, [#allocation5]
    $region9: #{tpu_custom_call.1} parent=1 // pred_fallthru
      _
    // Predicated region
    $region10: #{tpu_custom_call.1} parent=1 // pred_check
      _
    $region11: #{tpu_custom_call.1} parent=1 // pred_check_branch
      %31 = sbr.rel (0) target = $region13
    $region12: #{tpu_custom_call.1} parent=1 // pred_region
      %s33 = ssub.s32 128, 128
      %34 = vsyncadd [#allocation5], %s33
      %s36 = sshll.u32 [#allocation6], 4
      %s37 = int_to_ptr.vmem [resolvable:$true] %s36
      %39 = dma.hbm_to_vmem [thread:$0]  %s2, 128, %s37, [#allocation5]
    $region13: #{tpu_custom_call.1} parent=1 // pred_fallthru
      _
    // Predicated region
    $region14: #{tpu_custom_call.1} parent=1 // pred_check
      _
    $region15: #{tpu_custom_call.1} parent=1 // pred_check_branch
      %41 = sbr.rel (0) target = $region17
    $region16: #{tpu_custom_call.1} parent=1 // pred_region
      %42 = dma.done [#allocation3], 128
    $region17: #{tpu_custom_call.1} parent=1 // pred_fallthru
      _
    // Predicated region
    $region18: #{tpu_custom_call.1} parent=1 // pred_check
      _
    $region19: #{tpu_custom_call.1} parent=1 // pred_check_branch
      %44 = sbr.rel (0) target = $region21
    $region20: #{tpu_custom_call.1} parent=1 // pred_region
      %45 = dma.done [#allocation5], 128
    $region21: #{tpu_custom_call.1} parent=1 // pred_fallthru
      _
    // Predicated region
    $region22: #{tpu_custom_call.1} parent=1 // pred_check
      _
    $region23: #{tpu_custom_call.1} parent=1 // pred_check_branch
      %47 = sbr.rel (0) target = $region25
    $region24: #{tpu_custom_call.1} parent=1 // pred_region
      %48 = dma.done [#allocation5], 128
    $region25: #{tpu_custom_call.1} parent=1 // pred_fallthru
      _
    %v49 = vld [vmem:[#allocation2] sm:$0xff]
    %v50 = vld [vmem:[#allocation4] sm:$0xff]
    %v51 = vsub.f32 %v49, %v50
    %v52 = vand.u32 2147483647, %v51
    %vm53 = vcmask 261120
    %v54 = vsel %vm53, %v52, -inf
    %55 = vmax.xlane.f32.xlu0 %v54
    %v56 = vpop.xlane.xlu0 %55
    %v57 = vld [vmem:[#allocation6] sm:$0xff]
    %v58 = vsub.f32 %v49, %v57
    %v59 = vand.u32 2147483647, %v58
    %v60 = vsel %vm53, %v59, -inf
    %61 = vmax.xlane.f32.xlu0 %v60
    %v62 = vpop.xlane.xlu0 %61
    %vm63 = vcmask 7168
    %64 = vst.msk [vmem:[%s3] sm:$0xff] %vm63, %v56
    %vm65 = vcmask 15368
    %66 = vst.msk [vmem:[%s3] sm:$0xff] %vm65, %v62
    // Predicated region
    $region26: #{tpu_custom_call.1} parent=1 // pred_check
      _
    $region27: #{tpu_custom_call.1} parent=1 // pred_check_branch
      %68 = sbr.rel (0) target = $region29
    $region28: #{tpu_custom_call.1} parent=1 // pred_region
      _
    $region29: #{tpu_custom_call.1} parent=1 // pred_fallthru
      _
    // Predicated region
    $region30: #{tpu_custom_call.1} parent=1 // pred_check
      _
    $region31: #{tpu_custom_call.1} parent=1 // pred_check_branch
      %70 = sbr.rel (0) target = $region33
    $region32: #{tpu_custom_call.1} parent=1 // pred_region
      _
    $region33: #{tpu_custom_call.1} parent=1 // pred_fallthru
      _
    %71 = vsyncpa [#allocation3], 1
    %72 = vsyncpa [#allocation5], 1

</llo_original>
